<compile_context>
chip_gen: v5e
topology: v5e:2x2
jax: 0.10.0
libtpu: 0.0.40
codegen_flags: <defaults>
</compile_context>

<pallas_src>
import jax
import jax.numpy as jnp
from jax.experimental import pallas as pl
from jax.experimental.pallas import tpu as pltpu

_LANES = 128
_SUBLANES = 8
_MIB = 1024 * 1024


def _round_up(n, m):
    return ((n + m - 1) // m) * m


def mlp_kernel(x_ref, w1_ref, b1_ref, w2_ref, b2_ref, o_ref):
    """One batch tile: y = relu(x @ w1 + b1) @ w2 + b2 (weights already [in, out])."""
    # Canonical contractions: RHS is contracted on its sublane dim, so the resident
    # weight tiles feed the MXU directly (no in-kernel transpose / relayout).
    h = jnp.dot(x_ref[...], w1_ref[...], preferred_element_type=jnp.float32)
    h = jnp.maximum(h + b1_ref[...], 0.0)                        # bias + ReLU on the VPU
    y = jnp.dot(h.astype(w2_ref.dtype), w2_ref[...],
                preferred_element_type=jnp.float32)
    o_ref[...] = (y + b2_ref[...]).astype(o_ref.dtype)


def prepare_params(w1, b1, w2, b2, param_dtype=jnp.bfloat16):
    """One-time layout prep (parameter-load time; out of the per-call hot path).

    Transposes the PyTorch [out, in] weights to [in, out] and zero-pads every feature
    dim (input, hidden, output) up to a 128-lane multiple. Zero padding is exact for
    Linear+ReLU+Linear: padded hidden units see zero weights & zero bias -> relu(0)=0,
    and padded output columns are sliced off by the caller.
    """
    hidden, in_dim = w1.shape
    out_dim = w2.shape[0]
    in_p = _round_up(in_dim, _LANES)
    hid_p = _round_up(hidden, _LANES)
    out_p = _round_up(out_dim, _LANES)

    if param_dtype is not None:
        w1, b1, w2, b2 = (t.astype(param_dtype) for t in (w1, b1, w2, b2))

    w1t = jnp.pad(w1.T, ((0, in_p - in_dim), (0, hid_p - hidden)))     # [in_p,  hid_p]
    b1p = jnp.pad(b1, (0, hid_p - hidden)).reshape(1, hid_p)           # [1,     hid_p]
    w2t = jnp.pad(w2.T, ((0, hid_p - hidden), (0, out_p - out_dim)))   # [hid_p, out_p]
    b2p = jnp.pad(b2, (0, out_p - out_dim)).reshape(1, out_p)          # [1,     out_p]
    return (w1t, b1p, w2t, b2p), out_dim


def _vmem_policy():
    """Generation-aware (budget_bytes, vmem_limit_cap, tile_b_cap, min_grid_steps)."""
    try:
        cap = pltpu.get_tpu_info().vmem_capacity_bytes
    except Exception:
        cap = 64 * _MIB                 # unknown hardware -> assume smallest (v7x-like)
    if cap >= 96 * _MIB:                # v5e / v6e: 128 MiB VMEM per TensorCore
        return 100 * _MIB, 110 * _MIB, 1024, 1
    # v7x: 64 MiB per TensorCore; leave headroom for Mosaic scratch / DMA descriptors,
    # and keep >= 2 batch grid steps so both TensorCores get work.
    return 46 * _MIB, 54 * _MIB, 512, 2


def _pick_tile_b(batch, in_p, hid_p, out_p, p_item, out_item, budget, tile_cap, min_grid):
    """Largest batch tile (multiple of 8) whose VMEM working set fits the budget."""
    weights = (in_p * hid_p + hid_p * out_p + hid_p + out_p) * p_item   # Buffered(1)
    tile = min(tile_cap, _round_up(batch, _SUBLANES))
    if min_grid > 1 and batch >= min_grid * _SUBLANES:
        # Guarantee >= min_grid steps on the "parallel" axis (dual-TC sharding on v7x).
        tile = min(tile, _round_up(batch, min_grid * _SUBLANES) // min_grid)
    while tile > _SUBLANES:
        acts = 2 * tile * (in_p * p_item + out_p * out_item) + tile * hid_p * 4
        if weights + acts <= budget:
            break
        tile = max(_SUBLANES, _round_up(tile // 2, _SUBLANES))
    return max(tile, _SUBLANES)


def mlp_forward(x, params, out_dim, *, tile_b=None, out_dtype=None):
    """x: [B, input_dim]; params from prepare_params(). Returns [B, out_dim]."""
    w1t, b1p, w2t, b2p = params
    batch, in_dim = x.shape
    in_p, hid_p = w1t.shape
    out_p = w2t.shape[1]
    assert in_dim <= in_p, "x feature dim exceeds the prepared weights' input dim"

    if out_dtype is None:
        out_dtype = x.dtype             # preserve caller dtype (f32 out w/ bf16 params)
    if x.dtype != w1t.dtype:
        x = x.astype(w1t.dtype)         # bf16 operands -> bf16 MXU path

    p_item = jnp.dtype(w1t.dtype).itemsize
    out_item = jnp.dtype(out_dtype).itemsize

    budget, limit_cap, tile_cap, min_grid = _vmem_policy()
    if tile_b is None:
        tile_b = _pick_tile_b(batch, in_p, hid_p, out_p, p_item, out_item,
                              budget, tile_cap, min_grid)

    # Pad the batch to a tile multiple and the feature dim to in_p (zero rows/cols are
    # exact; padded batch rows are sliced off, padded features hit zero weights).
    batch_p = _round_up(batch, tile_b)
    if batch_p != batch or in_p != in_dim:
        x = jnp.pad(x, ((0, batch_p - batch), (0, in_p - in_dim)))
    grid = (batch_p // tile_b,)

    cost = pl.CostEstimate(
        flops=int(2 * batch_p * (in_p * hid_p + hid_p * out_p)),
        transcendentals=0,
        bytes_accessed=int(x.size * p_item
                           + (w1t.size + b1p.size + w2t.size + b2p.size) * p_item
                           + batch_p * out_p * out_item),
    )

    weights_bytes = (w1t.size + b1p.size + w2t.size + b2p.size) * p_item
    act_bytes = 2 * tile_b * (in_p * p_item + out_p * out_item)

    def build(single_buffer_weights):
        wmode = ({"pipeline_mode": pl.Buffered(1)} if single_buffer_weights else {})
        vmem_est = weights_bytes * (1 if single_buffer_weights else 2) + act_bytes
        compiler_params = pltpu.CompilerParams(
            dimension_semantics=("parallel",),     # megacore / v7x dual-TC batch sharding
            vmem_limit_bytes=int(min(max(int(1.25 * vmem_est) + 2 * _MIB, 32 * _MIB),
                                     limit_cap)),
        )
        return pl.pallas_call(
            mlp_kernel,
            out_shape=jax.ShapeDtypeStruct((batch_p, out_p), out_dtype),
            grid=grid,
            in_specs=[
                pl.BlockSpec((tile_b, in_p), lambda i: (i, 0)),            # x: streamed
                pl.BlockSpec((in_p, hid_p), lambda i: (0, 0), **wmode),    # w1: resident
                pl.BlockSpec((1, hid_p), lambda i: (0, 0), **wmode),       # b1: resident
                pl.BlockSpec((hid_p, out_p), lambda i: (0, 0), **wmode),   # w2: resident
                pl.BlockSpec((1, out_p), lambda i: (0, 0), **wmode),       # b2: resident
            ],
            out_specs=pl.BlockSpec((tile_b, out_p), lambda i: (i, 0)),
            compiler_params=compiler_params,
            cost_estimate=cost,
        )

    try:
        out_padded = build(single_buffer_weights=True)(x, w1t, b1p, w2t, b2p)
    except Exception:
        # Fallback for Pallas versions without per-BlockSpec pipeline_mode support:
        # default double-buffered resident weights (identical numerics).
        out_padded = build(single_buffer_weights=False)(x, w1t, b1p, w2t, b2p)

    return out_padded[:batch, :out_dim]


def init_linear(key, out_features, in_features):
    # Deterministic init mimicking nn.Linear's uniform(-1/sqrt(fan_in), +1/sqrt(fan_in)).
    kw, kb = jax.random.split(key)
    bound = 1.0 / jnp.sqrt(jnp.float32(in_features))
    w = jax.random.uniform(kw, (out_features, in_features), jnp.float32, -bound, bound)
    b = jax.random.uniform(kb, (out_features,), jnp.float32, -bound, bound)
    return w, b


if __name__ == "__main__":
    batch, input_dim, hidden_dim, output_dim = 8, 16, 32, 8

    key = jax.random.PRNGKey(0)
    kx, k1, k2 = jax.random.split(key, 3)

    x = jax.random.normal(kx, (batch, input_dim), jnp.float32)
    w1, b1 = init_linear(k1, hidden_dim, input_dim)
    w2, b2 = init_linear(k2, output_dim, hidden_dim)

    # Reference in plain JAX (same math as torch's nn.Sequential forward).
    ref = jnp.maximum(x @ w1.T + b1, 0.0) @ w2.T + b2

    # f32 params: exact path (tight tolerance).
    params_f32, out_dim = prepare_params(w1, b1, w2, b2, param_dtype=jnp.float32)
    out_f32 = jax.block_until_ready(mlp_forward(x, params_f32, out_dim))
    assert out_f32.shape == (batch, output_dim)
    assert jnp.allclose(out_f32, ref, atol=1e-5, rtol=1e-5)

    # Default production path: bf16 params, f32 MXU accumulation, f32 output.
    params_bf16, out_dim = prepare_params(w1, b1, w2, b2)
    out_bf16 = jax.block_until_ready(
        mlp_forward(x, params_bf16, out_dim, out_dtype=jnp.float32))
    assert out_bf16.shape == (batch, output_dim)
    assert out_bf16.dtype == jnp.float32
    assert jnp.allclose(out_bf16, ref, atol=5e-2, rtol=5e-2)

    print("KERNEL_OK")
</pallas_src>

<mosaic_0001>
module attributes {stable_mosaic.version = 11 : i64} {
  func.func @mlp_kernel(%arg0: i32, %arg1: memref<8x128xf32, #tpu.memory_space<vmem>>, %arg2: memref<128x128xf32, #tpu.memory_space<vmem>>, %arg3: memref<1x128xf32, #tpu.memory_space<vmem>>, %arg4: memref<128x128xf32, #tpu.memory_space<vmem>>, %arg5: memref<1x128xf32, #tpu.memory_space<vmem>>, %arg6: memref<8x128xf32, #tpu.memory_space<vmem>>) attributes {dimension_semantics = [#tpu.dimension_semantics<parallel>], iteration_bounds = array<i64: 1>, scalar_prefetch = 0 : i64, scratch_operands = 0 : i64, tpu.core_type = #tpu.core_type<tc>, window_params = [{transform_indices = @transform_0, window_bounds = array<i64: 8, 128>}, {pipeline_mode = #tpu.pipeline_mode<synchronous>, transform_indices = @transform_1, window_bounds = array<i64: 128, 128>}, {pipeline_mode = #tpu.pipeline_mode<synchronous>, transform_indices = @transform_2, window_bounds = array<i64: 1, 128>}, {pipeline_mode = #tpu.pipeline_mode<synchronous>, transform_indices = @transform_3, window_bounds = array<i64: 128, 128>}, {pipeline_mode = #tpu.pipeline_mode<synchronous>, transform_indices = @transform_4, window_bounds = array<i64: 1, 128>}, {transform_indices = @transform_5, window_bounds = array<i64: 8, 128>}]} {
    %c0 = arith.constant 0 : index
    %c0_0 = arith.constant 0 : index
    %0 = vector.load %arg1[%c0, %c0_0] : memref<8x128xf32, #tpu.memory_space<vmem>>, vector<8x128xf32>
    %c0_1 = arith.constant 0 : index
    %c0_2 = arith.constant 0 : index
    %1 = vector.load %arg2[%c0_1, %c0_2] : memref<128x128xf32, #tpu.memory_space<vmem>>, vector<128x128xf32>
    %cst = arith.constant dense<0.000000e+00> : vector<8x128xf32>
    %2 = tpu.matmul %0, %1, %cst {dimension_numbers = #tpu.dot_dimension_numbers<[1], [0], [0], [1], [0, 0, 1, 1], [], []>} : vector<8x128xf32>, vector<128x128xf32>, vector<8x128xf32> -> vector<8x128xf32>
    %c0_3 = arith.constant 0 : index
    %c0_4 = arith.constant 0 : index
    %3 = vector.load %arg3[%c0_3, %c0_4] : memref<1x128xf32, #tpu.memory_space<vmem>>, vector<1x128xf32>
    %4 = vector.broadcast %3 : vector<1x128xf32> to vector<8x128xf32>
    %5 = arith.addf %2, %4 : vector<8x128xf32>
    %cst_5 = arith.constant 0.000000e+00 : f32
    %6 = vector.broadcast %cst_5 : f32 to vector<8x128xf32>
    %7 = arith.maximumf %5, %6 : vector<8x128xf32>
    %c0_6 = arith.constant 0 : index
    %c0_7 = arith.constant 0 : index
    %8 = vector.load %arg4[%c0_6, %c0_7] : memref<128x128xf32, #tpu.memory_space<vmem>>, vector<128x128xf32>
    %cst_8 = arith.constant dense<0.000000e+00> : vector<8x128xf32>
    %9 = tpu.matmul %7, %8, %cst_8 {dimension_numbers = #tpu.dot_dimension_numbers<[1], [0], [0], [1], [0, 0, 1, 1], [], []>} : vector<8x128xf32>, vector<128x128xf32>, vector<8x128xf32> -> vector<8x128xf32>
    %c0_9 = arith.constant 0 : index
    %c0_10 = arith.constant 0 : index
    %10 = vector.load %arg5[%c0_9, %c0_10] : memref<1x128xf32, #tpu.memory_space<vmem>>, vector<1x128xf32>
    %11 = vector.broadcast %10 : vector<1x128xf32> to vector<8x128xf32>
    %12 = arith.addf %9, %11 : vector<8x128xf32>
    %c0_11 = arith.constant 0 : index
    %c0_12 = arith.constant 0 : index
    %13 = vector.load %arg6[%c0_11, %c0_12] : memref<8x128xf32, #tpu.memory_space<vmem>>, vector<8x128xf32>
    tpu.vector_store %arg6[%c0_11, %c0_12], %12 {strides = array<i32>} : memref<8x128xf32, #tpu.memory_space<vmem>>, vector<8x128xf32>,
    return
  }
  func.func @transform_0(%arg0: i32) -> (i32, i32) {
    %c0_i32 = arith.constant 0 : i32
    %c0_i32_0 = arith.constant 0 : i32
    return %arg0, %c0_i32 : i32, i32
  }
  func.func @transform_1(%arg0: i32) -> (i32, i32) {
    %c0_i32 = arith.constant 0 : i32
    %c0_i32_0 = arith.constant 0 : i32
    %c0_i32_1 = arith.constant 0 : i32
    return %c0_i32, %c0_i32_0 : i32, i32
  }
  func.func @transform_2(%arg0: i32) -> (i32, i32) {
    %c0_i32 = arith.constant 0 : i32
    %c0_i32_0 = arith.constant 0 : i32
    %c0_i32_1 = arith.constant 0 : i32
    return %c0_i32, %c0_i32_0 : i32, i32
  }
  func.func @transform_3(%arg0: i32) -> (i32, i32) {
    %c0_i32 = arith.constant 0 : i32
    %c0_i32_0 = arith.constant 0 : i32
    %c0_i32_1 = arith.constant 0 : i32
    return %c0_i32, %c0_i32_0 : i32, i32
  }
  func.func @transform_4(%arg0: i32) -> (i32, i32) {
    %c0_i32 = arith.constant 0 : i32
    %c0_i32_0 = arith.constant 0 : i32
    %c0_i32_1 = arith.constant 0 : i32
    return %c0_i32, %c0_i32_0 : i32, i32
  }
  func.func @transform_5(%arg0: i32) -> (i32, i32) {
    %c0_i32 = arith.constant 0 : i32
    %c0_i32_0 = arith.constant 0 : i32
    return %arg0, %c0_i32 : i32, i32
  }
}

module attributes {stable_mosaic.version = 11 : i64} {
  func.func @mlp_kernel(%arg0: i32, %arg1: memref<8x128xf32, #tpu.memory_space<vmem>>, %arg2: memref<128x128xf32, #tpu.memory_space<vmem>>, %arg3: memref<1x128xf32, #tpu.memory_space<vmem>>, %arg4: memref<128x128xf32, #tpu.memory_space<vmem>>, %arg5: memref<1x128xf32, #tpu.memory_space<vmem>>, %arg6: memref<8x128xf32, #tpu.memory_space<vmem>>) attributes {dimension_semantics = [#tpu.dimension_semantics<parallel>], iteration_bounds = array<i64: 1>, scalar_prefetch = 0 : i64, scratch_operands = 0 : i64, tpu.core_type = #tpu.core_type<tc>, window_params = [{transform_indices = @transform_0, window_bounds = array<i64: 8, 128>}, {pipeline_mode = #tpu.pipeline_mode<synchronous>, transform_indices = @transform_1, window_bounds = array<i64: 128, 128>}, {pipeline_mode = #tpu.pipeline_mode<synchronous>, transform_indices = @transform_2, window_bounds = array<i64: 1, 128>}, {pipeline_mode = #tpu.pipeline_mode<synchronous>, transform_indices = @transform_3, window_bounds = array<i64: 128, 128>}, {pipeline_mode = #tpu.pipeline_mode<synchronous>, transform_indices = @transform_4, window_bounds = array<i64: 1, 128>}, {transform_indices = @transform_5, window_bounds = array<i64: 8, 128>}]} {
    %c0 = arith.constant 0 : index
    %c0_0 = arith.constant 0 : index
    %0 = vector.load %arg1[%c0, %c0_0] : memref<8x128xf32, #tpu.memory_space<vmem>>, vector<8x128xf32>
    %c0_1 = arith.constant 0 : index
    %c0_2 = arith.constant 0 : index
    %1 = vector.load %arg2[%c0_1, %c0_2] : memref<128x128xf32, #tpu.memory_space<vmem>>, vector<128x128xf32>
    %cst = arith.constant dense<0.000000e+00> : vector<8x128xf32>
    %2 = tpu.matmul %0, %1, %cst {dimension_numbers = #tpu.dot_dimension_numbers<[1], [0], [0], [1], [0, 0, 1, 1], [], []>} : vector<8x128xf32>, vector<128x128xf32>, vector<8x128xf32> -> vector<8x128xf32>
    %c0_3 = arith.constant 0 : index
    %c0_4 = arith.constant 0 : index
    %3 = vector.load %arg3[%c0_3, %c0_4] : memref<1x128xf32, #tpu.memory_space<vmem>>, vector<1x128xf32>
    %4 = vector.broadcast %3 : vector<1x128xf32> to vector<8x128xf32>
    %5 = arith.addf %2, %4 : vector<8x128xf32>
    %cst_5 = arith.constant 0.000000e+00 : f32
    %6 = vector.broadcast %cst_5 : f32 to vector<8x128xf32>
    %7 = arith.maximumf %5, %6 : vector<8x128xf32>
    %c0_6 = arith.constant 0 : index
    %c0_7 = arith.constant 0 : index
    %8 = vector.load %arg4[%c0_6, %c0_7] : memref<128x128xf32, #tpu.memory_space<vmem>>, vector<128x128xf32>
    %cst_8 = arith.constant dense<0.000000e+00> : vector<8x128xf32>
    %9 = tpu.matmul %7, %8, %cst_8 {dimension_numbers = #tpu.dot_dimension_numbers<[1], [0], [0], [1], [0, 0, 1, 1], [], []>} : vector<8x128xf32>, vector<128x128xf32>, vector<8x128xf32> -> vector<8x128xf32>
    %c0_9 = arith.constant 0 : index
    %c0_10 = arith.constant 0 : index
    %10 = vector.load %arg5[%c0_9, %c0_10] : memref<1x128xf32, #tpu.memory_space<vmem>>, vector<1x128xf32>
    %11 = vector.broadcast %10 : vector<1x128xf32> to vector<8x128xf32>
    %12 = arith.addf %9, %11 : vector<8x128xf32>
    %c0_11 = arith.constant 0 : index
    %c0_12 = arith.constant 0 : index
    %13 = vector.load %arg6[%c0_11, %c0_12] : memref<8x128xf32, #tpu.memory_space<vmem>>, vector<8x128xf32>
    tpu.vector_store %arg6[%c0_11, %c0_12], %12 {strides = array<i32>} : memref<8x128xf32, #tpu.memory_space<vmem>>, vector<8x128xf32>,
    return
  }
  func.func @transform_0(%arg0: i32) -> (i32, i32) {
    %c0_i32 = arith.constant 0 : i32
    %c0_i32_0 = arith.constant 0 : i32
    return %arg0, %c0_i32 : i32, i32
  }
  func.func @transform_1(%arg0: i32) -> (i32, i32) {
    %c0_i32 = arith.constant 0 : i32
    %c0_i32_0 = arith.constant 0 : i32
    %c0_i32_1 = arith.constant 0 : i32
    return %c0_i32, %c0_i32_0 : i32, i32
  }
  func.func @transform_2(%arg0: i32) -> (i32, i32) {
    %c0_i32 = arith.constant 0 : i32
    %c0_i32_0 = arith.constant 0 : i32
    %c0_i32_1 = arith.constant 0 : i32
    return %c0_i32, %c0_i32_0 : i32, i32
  }
  func.func @transform_3(%arg0: i32) -> (i32, i32) {
    %c0_i32 = arith.constant 0 : i32
    %c0_i32_0 = arith.constant 0 : i32
    %c0_i32_1 = arith.constant 0 : i32
    return %c0_i32, %c0_i32_0 : i32, i32
  }
  func.func @transform_4(%arg0: i32) -> (i32, i32) {
    %c0_i32 = arith.constant 0 : i32
    %c0_i32_0 = arith.constant 0 : i32
    %c0_i32_1 = arith.constant 0 : i32
    return %c0_i32, %c0_i32_0 : i32, i32
  }
  func.func @transform_5(%arg0: i32) -> (i32, i32) {
    %c0_i32 = arith.constant 0 : i32
    %c0_i32_0 = arith.constant 0 : i32
    return %arg0, %c0_i32 : i32, i32
  }
}

</mosaic_0001>

<llo_original>
// kernel: tpu_custom_call.1
$region0: #{tpu_custom_call.1}
  #allocation0 [shape = 'u32[]', space=smem, size = 0x4, offset = 0x4, fixed_abs, tag = 'smem constant byte address 0x4 - core index']
  #allocation1 [shape = 'u32[72,128]{1,0:T(1,128)}', space=vmem, size = 0x9000, scoped, tag = 'internal scratch']
  %s0 = inlined_call_operand.hbm [shape: f32[8,128], index: 0, kind: input, shape index: {}]
  %s1 = inlined_call_operand.hbm [shape: f32[128,128], index: 1, kind: input, shape index: {}]
  %s2 = inlined_call_operand.vmem [shape: f32[1,128], index: 2, kind: input, shape index: {}]
  %s3 = inlined_call_operand.hbm [shape: f32[128,128], index: 3, kind: input, shape index: {}]
  %s4 = inlined_call_operand.vmem [shape: f32[1,128], index: 4, kind: input, shape index: {}]
  %s5 = inlined_call_operand.hbm [shape: f32[8,128], index: 5, kind: output, shape index: {}]
  %s6 = sld [smem:[#allocation0]]
  $region42: #{tpu_custom_call.1} parent=0
    _
  %s8 = ssub.s32 1, %s6
  %s9 = scalar_select 0, %s8, %s6
  $region1: #{tpu_custom_call.1} parent=0
    #allocation2 [shape = 'u8[4096]{0}', space=vmem, size = 0x1000, scoped, tag = 'input window, operand 0, single buffered']
    #allocation3 [shape = 's32[1]{0}', space=sflag, size = 0x4, scoped, tag = 'scoped memory for tpu_custom_call.1']
    #allocation4 [shape = 's32[1]{0}', space=sflag, size = 0x4, scoped, tag = 'scoped memory for tpu_custom_call.1']
    #allocation5 [shape = 'u8[65536]{0}', space=vmem, size = 0x10000, scoped, tag = 'input window, operand 1, single buffered']
    #allocation6 [shape = 's32[1]{0}', space=sflag, size = 0x4, scoped, tag = 'scoped memory for tpu_custom_call.1']
    #allocation7 [shape = 'u8[65536]{0}', space=vmem, size = 0x10000, scoped, tag = 'input window, operand 3, single buffered']
    #allocation8 [shape = 'u8[4096]{0}', space=vmem, size = 0x1000, scoped, tag = 'output window, operand 0, single buffered']
    %10 = vsyncpa [#allocation3], 0
    %11 = vsyncpa [#allocation6], 0
    %12 = vsyncpa [#allocation4], 0
    // Predicated region
    $region2: #{tpu_custom_call.1} parent=1 // pred_check
      _
    $region3: #{tpu_custom_call.1} parent=1 // pred_check_branch
      %14 = sbr.rel (0) target = $region5
    $region4: #{tpu_custom_call.1} parent=1 // pred_region
      %16 = vsyncadd [#allocation3], 0
      %s18 = sshll.u32 %s0, 4
      %s19 = int_to_ptr.hbm [resolvable:$true] %s18
      %s20 = sshll.u32 [#allocation2], 4
      %s21 = int_to_ptr.vmem [resolvable:$true] %s20
      %23 = dma.hbm_to_vmem [thread:$0]  %s19, 128, %s21, [#allocation3]
    $region5: #{tpu_custom_call.1} parent=1 // pred_fallthru
      _
    // Predicated region
    $region6: #{tpu_custom_call.1} parent=1 // pred_check
      _
    $region7: #{tpu_custom_call.1} parent=1 // pred_check_branch
      %25 = sbr.rel (0) target = $region9
    $region8: #{tpu_custom_call.1} parent=1 // pred_region
      %27 = vsyncadd [#allocation6], 0
      %s28 = sshll.u32 %s1, 4
      %s29 = int_to_ptr.hbm [resolvable:$true] %s28
      %s30 = sshll.u32 [#allocation5], 4
      %s31 = int_to_ptr.vmem [resolvable:$true] %s30
      %36 = dma.hbm_to_vmem [thread:$0]  %s29, 2048, %s31, [#allocation6], 128, 128, 8
    $region9: #{tpu_custom_call.1} parent=1 // pred_fallthru
      _
    // Predicated region
    $region10: #{tpu_custom_call.1} parent=1 // pred_check
      _
    $region11: #{tpu_custom_call.1} parent=1 // pred_check_branch
      %38 = sbr.rel (0) target = $region13
    $region12: #{tpu_custom_call.1} parent=1 // pred_region
      _
    $region13: #{tpu_custom_call.1} parent=1 // pred_fallthru
      _
    // Predicated region
    $region14: #{tpu_custom_call.1} parent=1 // pred_check
      _
    $region15: #{tpu_custom_call.1} parent=1 // pred_check_branch
      %40 = sbr.rel (0) target = $region17
    $region16: #{tpu_custom_call.1} parent=1 // pred_region
      %42 = vsyncadd [#allocation6], 0
      %s43 = sshll.u32 %s3, 4
      %s44 = int_to_ptr.hbm [resolvable:$true] %s43
      %s45 = sshll.u32 [#allocation7], 4
      %s46 = int_to_ptr.vmem [resolvable:$true] %s45
      %51 = dma.hbm_to_vmem [thread:$0]  %s44, 2048, %s46, [#allocation6], 128, 128, 8
    $region17: #{tpu_custom_call.1} parent=1 // pred_fallthru
      _
    // Predicated region
    $region18: #{tpu_custom_call.1} parent=1 // pred_check
      _
    $region19: #{tpu_custom_call.1} parent=1 // pred_check_branch
      %53 = sbr.rel (0) target = $region21
    $region20: #{tpu_custom_call.1} parent=1 // pred_region
      _
    $region21: #{tpu_custom_call.1} parent=1 // pred_fallthru
      _
    // Predicated region
    $region22: #{tpu_custom_call.1} parent=1 // pred_check
      _
    $region23: #{tpu_custom_call.1} parent=1 // pred_check_branch
      %55 = sbr.rel (0) target = $region25
    $region24: #{tpu_custom_call.1} parent=1 // pred_region
      %57 = dma.done [#allocation3], 128
    $region25: #{tpu_custom_call.1} parent=1 // pred_fallthru
      _
    // Predicated region
    $region26: #{tpu_custom_call.1} parent=1 // pred_check
      _
    $region27: #{tpu_custom_call.1} parent=1 // pred_check_branch
      %59 = sbr.rel (0) target = $region29
    $region28: #{tpu_custom_call.1} parent=1 // pred_region
      %61 = dma.done [#allocation6], 2048
    $region29: #{tpu_custom_call.1} parent=1 // pred_fallthru
      _
    // Predicated region
    $region30: #{tpu_custom_call.1} parent=1 // pred_check
      _
    $region31: #{tpu_custom_call.1} parent=1 // pred_check_branch
      %63 = sbr.rel (0) target = $region33
    $region32: #{tpu_custom_call.1} parent=1 // pred_region
      %65 = dma.done [#allocation6], 2048
    $region33: #{tpu_custom_call.1} parent=1 // pred_fallthru
      _
    %v66 = vld [vmem:[#allocation2] sm:$0xff]
    %v67 = vld [vmem:[#allocation5] sm:$0xff]
    %v68 = vld [vmem:[#allocation5 + $0x8] sm:$0xff]
    %v69 = vld [vmem:[#allocation5 + $0x10] sm:$0xff]
    %v70 = vld [vmem:[#allocation5 + $0x18] sm:$0xff]
    %v71 = vld [vmem:[#allocation5 + $0x20] sm:$0xff]
    %v72 = vld [vmem:[#allocation5 + $0x28] sm:$0xff]
    %v73 = vld [vmem:[#allocation5 + $0x30] sm:$0xff]
    %v74 = vld [vmem:[#allocation5 + $0x38] sm:$0xff]
    %v75 = vld [vmem:[#allocation5 + $0x40] sm:$0xff]
    %v76 = vld [vmem:[#allocation5 + $0x48] sm:$0xff]
    %v77 = vld [vmem:[#allocation5 + $0x50] sm:$0xff]
    %v78 = vld [vmem:[#allocation5 + $0x58] sm:$0xff]
    %v79 = vld [vmem:[#allocation5 + $0x60] sm:$0xff]
    %v80 = vld [vmem:[#allocation5 + $0x68] sm:$0xff]
    %v81 = vld [vmem:[#allocation5 + $0x70] sm:$0xff]
    %v82 = vld [vmem:[#allocation5 + $0x78] sm:$0xff]
    %v83 = vld [vmem:[%s2] sm:$0x1]
    %v85 = vperm.slane %v83, 0
    %87 = vmatpush.msra.mxu0 %v82
    %88 = vmatpush.msra.mxu0 %v81
    %89 = vmatpush.msra.mxu0 %v80
    %90 = vmatpush.msra.mxu0 %v79
    %91 = vmatpush.msra.mxu0 %v78
    %92 = vmatpush.msra.mxu0 %v77
    %93 = vmatpush.msra.mxu0 %v76
    %94 = vmatpush.msra.mxu0 %v75
    %95 = vmatpush.msra.mxu0 %v74
    %96 = vmatpush.msra.mxu0 %v73
    %97 = vmatpush.msra.mxu0 %v72
    %98 = vmatpush.msra.mxu0 %v71
    %99 = vmatpush.msra.mxu0 %v70
    %100 = vmatpush.msra.mxu0 %v69
    %101 = vmatpush.msra.mxu0 %v68
    %102 = vmatpush.msra.mxu0 %v67
    %103 = vmatmul.f32.gmra.mxu0 %v66
    %v104 = vpop.f32.mrf.mxu0
    %v105 = vadd.f32 %v85, %v104
    %106 = vdwg.mxu0
    %v107 = vmax.f32 %v105, 0.0
    %v108 = vld [vmem:[#allocation7] sm:$0xff]
    %v109 = vld [vmem:[#allocation7 + $0x8] sm:$0xff]
    %v110 = vld [vmem:[#allocation7 + $0x10] sm:$0xff]
    %v111 = vld [vmem:[#allocation7 + $0x18] sm:$0xff]
    %v112 = vld [vmem:[#allocation7 + $0x20] sm:$0xff]
    %v113 = vld [vmem:[#allocation7 + $0x28] sm:$0xff]
    %v114 = vld [vmem:[#allocation7 + $0x30] sm:$0xff]
    %v115 = vld [vmem:[#allocation7 + $0x38] sm:$0xff]
    %v116 = vld [vmem:[#allocation7 + $0x40] sm:$0xff]
    %v117 = vld [vmem:[#allocation7 + $0x48] sm:$0xff]
    %v118 = vld [vmem:[#allocation7 + $0x50] sm:$0xff]
    %v119 = vld [vmem:[#allocation7 + $0x58] sm:$0xff]
    %v120 = vld [vmem:[#allocation7 + $0x60] sm:$0xff]
    %v121 = vld [vmem:[#allocation7 + $0x68] sm:$0xff]
    %v122 = vld [vmem:[#allocation7 + $0x70] sm:$0xff]
    %v123 = vld [vmem:[#allocation7 + $0x78] sm:$0xff]
    %v124 = vld [vmem:[%s4] sm:$0x1]
    %v126 = vperm.slane %v124, 0
    %128 = vmatpush.msra.mxu0 %v123
    %129 = vmatpush.msra.mxu0 %v122
    %130 = vmatpush.msra.mxu0 %v121
    %131 = vmatpush.msra.mxu0 %v120
    %132 = vmatpush.msra.mxu0 %v119
    %133 = vmatpush.msra.mxu0 %v118
    %134 = vmatpush.msra.mxu0 %v117
    %135 = vmatpush.msra.mxu0 %v116
    %136 = vmatpush.msra.mxu0 %v115
    %137 = vmatpush.msra.mxu0 %v114
    %138 = vmatpush.msra.mxu0 %v113
    %139 = vmatpush.msra.mxu0 %v112
    %140 = vmatpush.msra.mxu0 %v111
    %141 = vmatpush.msra.mxu0 %v110
    %142 = vmatpush.msra.mxu0 %v109
    %143 = vmatpush.msra.mxu0 %v108
    %144 = vmatmul.f32.gmra.mxu0 %v107
    %v145 = vpop.f32.mrf.mxu0
    %v146 = vadd.f32 %v126, %v145
    %147 = vdwg.mxu0
    %148 = vst [vmem:[#allocation8] sm:$0xff] %v146
    // Predicated region
    $region34: #{tpu_custom_call.1} parent=1 // pred_check
      _
    $region35: #{tpu_custom_call.1} parent=1 // pred_check_branch
      %150 = sbr.rel (0) target = $region37
    $region36: #{tpu_custom_call.1} parent=1 // pred_region
      %152 = vsyncadd [#allocation4], 0
      %s154 = sshll.u32 [#allocation8], 4
      %s155 = int_to_ptr.vmem [resolvable:$true] %s154
      %s156 = sshll.u32 %s5, 4
      %s157 = int_to_ptr.hbm [resolvable:$true] %s156
      %159 = dma.vmem_to_hbm [thread:$0]  %s155, 128, %s157, [#allocation4]
    $region37: #{tpu_custom_call.1} parent=1 // pred_fallthru
      _
    // Predicated region
    $region38: #{tpu_custom_call.1} parent=1 // pred_check
      _
    $region39: #{tpu_custom_call.1} parent=1 // pred_check_branch
      %161 = sbr.rel (0) target = $region41
    $region40: #{tpu_custom_call.1} parent=1 // pred_region
      %163 = dma.done [#allocation4], 128
    $region41: #{tpu_custom_call.1} parent=1 // pred_fallthru
      _
    %164 = vsyncpa [#allocation3], 1
    %165 = vsyncpa [#allocation6], 1
    %166 = vsyncpa [#allocation4], 1

// kernel: tpu_custom_call.1
$region0: #{tpu_custom_call.1}
  #allocation0 [shape = 'u32[]', space=smem, size = 0x4, offset = 0x4, fixed_abs, tag = 'smem constant byte address 0x4 - core index']
  #allocation1 [shape = 'u32[72,128]{1,0:T(1,128)}', space=vmem, size = 0x9000, scoped, tag = 'internal scratch']
  %s0 = inlined_call_operand.hbm [shape: f32[8,128], index: 0, kind: input, shape index: {}]
  %s1 = inlined_call_operand.hbm [shape: f32[128,128], index: 1, kind: input, shape index: {}]
  %s2 = inlined_call_operand.vmem [shape: f32[1,128], index: 2, kind: input, shape index: {}]
  %s3 = inlined_call_operand.hbm [shape: f32[128,128], index: 3, kind: input, shape index: {}]
  %s4 = inlined_call_operand.vmem [shape: f32[1,128], index: 4, kind: input, shape index: {}]
  %s5 = inlined_call_operand.hbm [shape: f32[8,128], index: 5, kind: output, shape index: {}]
  %s6 = sld [smem:[#allocation0]]
  $region42: #{tpu_custom_call.1} parent=0
    _
  %s8 = ssub.s32 1, %s6
  %s9 = scalar_select 0, %s8, %s6
  $region1: #{tpu_custom_call.1} parent=0
    #allocation2 [shape = 'u8[4096]{0}', space=vmem, size = 0x1000, scoped, tag = 'input window, operand 0, single buffered']
    #allocation3 [shape = 's32[1]{0}', space=sflag, size = 0x4, scoped, tag = 'scoped memory for tpu_custom_call.1']
    #allocation4 [shape = 's32[1]{0}', space=sflag, size = 0x4, scoped, tag = 'scoped memory for tpu_custom_call.1']
    #allocation5 [shape = 'u8[65536]{0}', space=vmem, size = 0x10000, scoped, tag = 'input window, operand 1, single buffered']
    #allocation6 [shape = 's32[1]{0}', space=sflag, size = 0x4, scoped, tag = 'scoped memory for tpu_custom_call.1']
    #allocation7 [shape = 'u8[65536]{0}', space=vmem, size = 0x10000, scoped, tag = 'input window, operand 3, single buffered']
    #allocation8 [shape = 'u8[4096]{0}', space=vmem, size = 0x1000, scoped, tag = 'output window, operand 0, single buffered']
    %10 = vsyncpa [#allocation3], 0
    %11 = vsyncpa [#allocation6], 0
    %12 = vsyncpa [#allocation4], 0
    // Predicated region
    $region2: #{tpu_custom_call.1} parent=1 // pred_check
      _
    $region3: #{tpu_custom_call.1} parent=1 // pred_check_branch
      %14 = sbr.rel (0) target = $region5
    $region4: #{tpu_custom_call.1} parent=1 // pred_region
      %16 = vsyncadd [#allocation3], 0
      %s18 = sshll.u32 %s0, 4
      %s19 = int_to_ptr.hbm [resolvable:$true] %s18
      %s20 = sshll.u32 [#allocation2], 4
      %s21 = int_to_ptr.vmem [resolvable:$true] %s20
      %23 = dma.hbm_to_vmem [thread:$0]  %s19, 128, %s21, [#allocation3]
    $region5: #{tpu_custom_call.1} parent=1 // pred_fallthru
      _
    // Predicated region
    $region6: #{tpu_custom_call.1} parent=1 // pred_check
      _
    $region7: #{tpu_custom_call.1} parent=1 // pred_check_branch
      %25 = sbr.rel (0) target = $region9
    $region8: #{tpu_custom_call.1} parent=1 // pred_region
      %27 = vsyncadd [#allocation6], 0
      %s28 = sshll.u32 %s1, 4
      %s29 = int_to_ptr.hbm [resolvable:$true] %s28
      %s30 = sshll.u32 [#allocation5], 4
      %s31 = int_to_ptr.vmem [resolvable:$true] %s30
      %36 = dma.hbm_to_vmem [thread:$0]  %s29, 2048, %s31, [#allocation6], 128, 128, 8
    $region9: #{tpu_custom_call.1} parent=1 // pred_fallthru
      _
    // Predicated region
    $region10: #{tpu_custom_call.1} parent=1 // pred_check
      _
    $region11: #{tpu_custom_call.1} parent=1 // pred_check_branch
      %38 = sbr.rel (0) target = $region13
    $region12: #{tpu_custom_call.1} parent=1 // pred_region
      _
    $region13: #{tpu_custom_call.1} parent=1 // pred_fallthru
      _
    // Predicated region
    $region14: #{tpu_custom_call.1} parent=1 // pred_check
      _
    $region15: #{tpu_custom_call.1} parent=1 // pred_check_branch
      %40 = sbr.rel (0) target = $region17
    $region16: #{tpu_custom_call.1} parent=1 // pred_region
      %42 = vsyncadd [#allocation6], 0
      %s43 = sshll.u32 %s3, 4
      %s44 = int_to_ptr.hbm [resolvable:$true] %s43
      %s45 = sshll.u32 [#allocation7], 4
      %s46 = int_to_ptr.vmem [resolvable:$true] %s45
      %51 = dma.hbm_to_vmem [thread:$0]  %s44, 2048, %s46, [#allocation6], 128, 128, 8
    $region17: #{tpu_custom_call.1} parent=1 // pred_fallthru
      _
    // Predicated region
    $region18: #{tpu_custom_call.1} parent=1 // pred_check
      _
    $region19: #{tpu_custom_call.1} parent=1 // pred_check_branch
      %53 = sbr.rel (0) target = $region21
    $region20: #{tpu_custom_call.1} parent=1 // pred_region
      _
    $region21: #{tpu_custom_call.1} parent=1 // pred_fallthru
      _
    // Predicated region
    $region22: #{tpu_custom_call.1} parent=1 // pred_check
      _
    $region23: #{tpu_custom_call.1} parent=1 // pred_check_branch
      %55 = sbr.rel (0) target = $region25
    $region24: #{tpu_custom_call.1} parent=1 // pred_region
      %57 = dma.done [#allocation3], 128
    $region25: #{tpu_custom_call.1} parent=1 // pred_fallthru
      _
    // Predicated region
    $region26: #{tpu_custom_call.1} parent=1 // pred_check
      _
    $region27: #{tpu_custom_call.1} parent=1 // pred_check_branch
      %59 = sbr.rel (0) target = $region29
    $region28: #{tpu_custom_call.1} parent=1 // pred_region
      %61 = dma.done [#allocation6], 2048
    $region29: #{tpu_custom_call.1} parent=1 // pred_fallthru
      _
    // Predicated region
    $region30: #{tpu_custom_call.1} parent=1 // pred_check
      _
    $region31: #{tpu_custom_call.1} parent=1 // pred_check_branch
      %63 = sbr.rel (0) target = $region33
    $region32: #{tpu_custom_call.1} parent=1 // pred_region
      %65 = dma.done [#allocation6], 2048
    $region33: #{tpu_custom_call.1} parent=1 // pred_fallthru
      _
    %v66 = vld [vmem:[#allocation2] sm:$0xff]
    %v67 = vld [vmem:[#allocation5] sm:$0xff]
    %v68 = vld [vmem:[#allocation5 + $0x8] sm:$0xff]
    %v69 = vld [vmem:[#allocation5 + $0x10] sm:$0xff]
    %v70 = vld [vmem:[#allocation5 + $0x18] sm:$0xff]
    %v71 = vld [vmem:[#allocation5 + $0x20] sm:$0xff]
    %v72 = vld [vmem:[#allocation5 + $0x28] sm:$0xff]
    %v73 = vld [vmem:[#allocation5 + $0x30] sm:$0xff]
    %v74 = vld [vmem:[#allocation5 + $0x38] sm:$0xff]
    %v75 = vld [vmem:[#allocation5 + $0x40] sm:$0xff]
    %v76 = vld [vmem:[#allocation5 + $0x48] sm:$0xff]
    %v77 = vld [vmem:[#allocation5 + $0x50] sm:$0xff]
    %v78 = vld [vmem:[#allocation5 + $0x58] sm:$0xff]
    %v79 = vld [vmem:[#allocation5 + $0x60] sm:$0xff]
    %v80 = vld [vmem:[#allocation5 + $0x68] sm:$0xff]
    %v81 = vld [vmem:[#allocation5 + $0x70] sm:$0xff]
    %v82 = vld [vmem:[#allocation5 + $0x78] sm:$0xff]
    %v83 = vld [vmem:[%s2] sm:$0x1]
    %v85 = vperm.slane %v83, 0
    %87 = vmatpush.msra.mxu0 %v82
    %88 = vmatpush.msra.mxu0 %v81
    %89 = vmatpush.msra.mxu0 %v80
    %90 = vmatpush.msra.mxu0 %v79
    %91 = vmatpush.msra.mxu0 %v78
    %92 = vmatpush.msra.mxu0 %v77
    %93 = vmatpush.msra.mxu0 %v76
    %94 = vmatpush.msra.mxu0 %v75
    %95 = vmatpush.msra.mxu0 %v74
    %96 = vmatpush.msra.mxu0 %v73
    %97 = vmatpush.msra.mxu0 %v72
    %98 = vmatpush.msra.mxu0 %v71
    %99 = vmatpush.msra.mxu0 %v70
    %100 = vmatpush.msra.mxu0 %v69
    %101 = vmatpush.msra.mxu0 %v68
    %102 = vmatpush.msra.mxu0 %v67
    %103 = vmatmul.f32.gmra.mxu0 %v66
    %v104 = vpop.f32.mrf.mxu0
    %v105 = vadd.f32 %v85, %v104
    %106 = vdwg.mxu0
    %v107 = vmax.f32 %v105, 0.0
    %v108 = vld [vmem:[#allocation7] sm:$0xff]
    %v109 = vld [vmem:[#allocation7 + $0x8] sm:$0xff]
    %v110 = vld [vmem:[#allocation7 + $0x10] sm:$0xff]
    %v111 = vld [vmem:[#allocation7 + $0x18] sm:$0xff]
    %v112 = vld [vmem:[#allocation7 + $0x20] sm:$0xff]
    %v113 = vld [vmem:[#allocation7 + $0x28] sm:$0xff]
    %v114 = vld [vmem:[#allocation7 + $0x30] sm:$0xff]
    %v115 = vld [vmem:[#allocation7 + $0x38] sm:$0xff]
    %v116 = vld [vmem:[#allocation7 + $0x40] sm:$0xff]
    %v117 = vld [vmem:[#allocation7 + $0x48] sm:$0xff]
    %v118 = vld [vmem:[#allocation7 + $0x50] sm:$0xff]
    %v119 = vld [vmem:[#allocation7 + $0x58] sm:$0xff]
    %v120 = vld [vmem:[#allocation7 + $0x60] sm:$0xff]
    %v121 = vld [vmem:[#allocation7 + $0x68] sm:$0xff]
    %v122 = vld [vmem:[#allocation7 + $0x70] sm:$0xff]
    %v123 = vld [vmem:[#allocation7 + $0x78] sm:$0xff]
    %v124 = vld [vmem:[%s4] sm:$0x1]
    %v126 = vperm.slane %v124, 0
    %128 = vmatpush.msra.mxu0 %v123
    %129 = vmatpush.msra.mxu0 %v122
    %130 = vmatpush.msra.mxu0 %v121
    %131 = vmatpush.msra.mxu0 %v120
    %132 = vmatpush.msra.mxu0 %v119
    %133 = vmatpush.msra.mxu0 %v118
    %134 = vmatpush.msra.mxu0 %v117
    %135 = vmatpush.msra.mxu0 %v116
    %136 = vmatpush.msra.mxu0 %v115
    %137 = vmatpush.msra.mxu0 %v114
    %138 = vmatpush.msra.mxu0 %v113
    %139 = vmatpush.msra.mxu0 %v112
    %140 = vmatpush.msra.mxu0 %v111
    %141 = vmatpush.msra.mxu0 %v110
    %142 = vmatpush.msra.mxu0 %v109
    %143 = vmatpush.msra.mxu0 %v108
    %144 = vmatmul.f32.gmra.mxu0 %v107
    %v145 = vpop.f32.mrf.mxu0
    %v146 = vadd.f32 %v126, %v145
    %147 = vdwg.mxu0
    %148 = vst [vmem:[#allocation8] sm:$0xff] %v146
    // Predicated region
    $region34: #{tpu_custom_call.1} parent=1 // pred_check
      _
    $region35: #{tpu_custom_call.1} parent=1 // pred_check_branch
      %150 = sbr.rel (0) target = $region37
    $region36: #{tpu_custom_call.1} parent=1 // pred_region
      %152 = vsyncadd [#allocation4], 0
      %s154 = sshll.u32 [#allocation8], 4
      %s155 = int_to_ptr.vmem [resolvable:$true] %s154
      %s156 = sshll.u32 %s5, 4
      %s157 = int_to_ptr.hbm [resolvable:$true] %s156
      %159 = dma.vmem_to_hbm [thread:$0]  %s155, 128, %s157, [#allocation4]
    $region37: #{tpu_custom_call.1} parent=1 // pred_fallthru
      _
    // Predicated region
    $region38: #{tpu_custom_call.1} parent=1 // pred_check
      _
    $region39: #{tpu_custom_call.1} parent=1 // pred_check_branch
      %161 = sbr.rel (0) target = $region41
    $region40: #{tpu_custom_call.1} parent=1 // pred_region
      %163 = dma.done [#allocation4], 128
    $region41: #{tpu_custom_call.1} parent=1 // pred_fallthru
      _
    %164 = vsyncpa [#allocation3], 1
    %165 = vsyncpa [#allocation6], 1
    %166 = vsyncpa [#allocation4], 1

</llo_original>
